<compile_context>
chip_gen: v5e
topology: v5e:2x2
jax: 0.10.0
libtpu: 0.0.40
codegen_flags: <defaults>
</compile_context>

<pallas_src>
import functools

import jax
import jax.numpy as jnp
from jax import lax
from jax.experimental import pallas as pl
from jax.experimental.pallas import tpu as pltpu


def _cab_kernel(p_ref, wc_ref, b_ref, wqkv_ref, mask_ref, out_ref, attn_ref,
                *, nb, HW, Cout):
    """Fused forward for one block of `nb` images.

    p:    (nb*HW, 9*Cin)    im2col'd 3x3 patches
    wc:   (9*Cin, Cout)     conv weight with BN scale folded in (resident)
    b:    (1, Cout)         folded conv bias + BN shift            (resident)
    wqkv: (Cout, 3*Cout)    1x1 qkv weight, softmax scale folded in (resident)
    mask: (Cout, Cout)      block-diagonal head mask               (resident)
    out:  (nb, Cout, HW)    attention output, channel-major
    attn: (nb, Cout, Cout)  dense (block-diagonal) softmax attention maps
    """
    # ---- conv3x3 (im2col) + folded BN + ReLU: one MXU matmul, M = nb*HW ----
    feat = jnp.dot(p_ref[...], wc_ref[...], preferred_element_type=jnp.float32)
    feat = jnp.maximum(feat + b_ref[...], 0.0)                # (nb*HW, Cout)

    # ---- 1x1 conv -> qkv (no bias); scale pre-folded into the q columns ----
    qkv = jnp.dot(feat, wqkv_ref[...],
                  preferred_element_type=jnp.float32)         # (nb*HW, 3*Cout)
    qkv = qkv.reshape(nb, HW, 3 * Cout)                       # sublane-aligned split
    q = qkv[:, :, :Cout]
    k = qkv[:, :, Cout:2 * Cout]
    v = qkv[:, :, 2 * Cout:]

    # ---- head-dense channel attention ---------------------------------------
    # S[b, i, j] = sum_n q[b, n, i] * k[b, n, j]   (already scaled via wqkv)
    s = lax.dot_general(q, k, (((1,), (1,)), ((0,), (0,))),
                        preferred_element_type=jnp.float32)   # (nb, Cout, Cout)
    s = s + mask_ref[...]                                     # off-head -> -1e30
    m = jnp.max(s, axis=-1, keepdims=True)
    e = jnp.exp(s - m)
    a = e * pl.reciprocal(jnp.sum(e, axis=-1, keepdims=True), approx=False)
    attn_ref[...] = a.astype(attn_ref.dtype)

    # O^T[b, c, n] = sum_j A[b, c, j] * V[b, n, j]  (channel-major output)
    out_ref[...] = lax.dot_general(
        a, v, (((2,), (2,)), ((0,), (0,))),
        preferred_element_type=jnp.float32).astype(out_ref.dtype)


def _pick_batch_block(B, max_nb=8):
    """Largest divisor of B (<= max_nb) that still leaves >= 2 grid steps."""
    divisors = [nb for nb in range(1, min(B, max_nb) + 1) if B % nb == 0]
    two_step = [nb for nb in divisors if B // nb >= 2]   # keep both v7x TCs busy
    return max(two_step) if two_step else max(divisors)


def class_attention_block_forward(x, conv_w, conv_b, gamma, beta,
                                  running_mean, running_var, qkv_w,
                                  y=None, heads=4, groups=1, eps=1e-5,
                                  batch_block=None):
    """Eval-mode forward of ClassAttentionBlock. Returns (out, attention).

    x:      (B, Cin, H, W)   float32 (PyTorch NCHW)
    conv_w: (Cout, Cin, 3, 3), conv_b: (Cout,)
    gamma/beta/running_mean/running_var: (Cout,)  (BatchNorm2d, eval)
    qkv_w:  (3*Cout, Cout, 1, 1)
    """
    assert groups == 1, "TODO(synk): grouped conv / grouped qkv not implemented"
    del y  # with groups == 1, class_mask[y] is identically zero (no-op)

    B, Cin, H, W = x.shape
    Cout = conv_w.shape[0]
    dh = Cout // heads
    HW = H * W
    scale = float(Cout) ** -0.5

    nb = batch_block if batch_block is not None else _pick_batch_block(B)
    assert B % nb == 0

    # --- fold BatchNorm (eval) + conv bias into conv weight / one shift ------
    bn_scale = gamma / jnp.sqrt(running_var + eps)            # (Cout,)
    bn_shift = beta - running_mean * bn_scale
    w_eff = conv_w * bn_scale[:, None, None, None]            # (Cout, Cin, 3, 3)
    b_eff = (conv_b * bn_scale + bn_shift).reshape(1, Cout)
    wc = jnp.transpose(w_eff, (2, 3, 1, 0)).reshape(9 * Cin, Cout)  # (9Cin, Cout)

    # --- qkv 1x1 weight; fold softmax scale into the q columns ---------------
    wqkv = jnp.transpose(qkv_w.reshape(3 * Cout, Cout), (1, 0))     # (Cout, 3Cout)
    wqkv = wqkv.at[:, :Cout].multiply(scale)

    # --- im2col: 3x3 'same' conv patches, laid out (B*HW, 9*Cin) -------------
    xn = jnp.transpose(x, (0, 2, 3, 1))                        # NHWC
    xp = jnp.pad(xn, ((0, 0), (1, 1), (1, 1), (0, 0)))
    taps = [xp[:, dy:dy + H, dx:dx + W, :]
            for dy in range(3) for dx in range(3)]             # tap-major = wc order
    patches = jnp.concatenate(taps, axis=-1).reshape(B * HW, 9 * Cin)

    # --- block-diagonal head mask (class_mask is all-zero for groups=1) ------
    head_id = jnp.arange(Cout) // dh
    mask = jnp.where(head_id[:, None] == head_id[None, :],
                     0.0, -1e30).astype(jnp.float32)           # (Cout, Cout)

    kernel = functools.partial(_cab_kernel, nb=nb, HW=HW, Cout=Cout)

    out_t, attn_full = pl.pallas_call(
        kernel,
        out_shape=(jax.ShapeDtypeStruct((B, Cout, HW), x.dtype),
                   jax.ShapeDtypeStruct((B, Cout, Cout), jnp.float32)),
        grid=(B // nb,),
        in_specs=[
            pl.BlockSpec((nb * HW, 9 * Cin), lambda b: (b, 0)),     # streamed
            pl.BlockSpec((9 * Cin, Cout), lambda b: (0, 0)),        # resident
            pl.BlockSpec((1, Cout), lambda b: (0, 0)),              # resident
            pl.BlockSpec((Cout, 3 * Cout), lambda b: (0, 0)),       # resident
            pl.BlockSpec((Cout, Cout), lambda b: (0, 0)),           # resident
        ],
        out_specs=(
            pl.BlockSpec((nb, Cout, HW), lambda b: (b, 0, 0)),
            pl.BlockSpec((nb, Cout, Cout), lambda b: (b, 0, 0)),
        ),
        compiler_params=pltpu.CompilerParams(
            dimension_semantics=("parallel",),
            vmem_limit_bytes=32 * 1024 * 1024),
    )(patches, wc, b_eff, wqkv, mask)

    # Wrapper-side layout plumbing (outside the kernel, cheap XLA ops):
    out = out_t.reshape(B, Cout, H, W)                         # NCHW
    ab = attn_full.reshape(B, heads, dh, heads, dh)
    attn = jnp.stack([ab[:, h, :, h, :] for h in range(heads)], axis=1)
    return out, attn


def _reference(x, conv_w, conv_b, gamma, beta, rmean, rvar, qkv_w,
               heads=4, eps=1e-5):
    y = lax.conv_general_dilated(x, conv_w, window_strides=(1, 1),
                                 padding=((1, 1), (1, 1)),
                                 dimension_numbers=('NCHW', 'OIHW', 'NCHW'))
    y = y + conv_b[None, :, None, None]
    inv = 1.0 / jnp.sqrt(rvar + eps)
    y = ((y - rmean[None, :, None, None]) * inv[None, :, None, None]
         * gamma[None, :, None, None] + beta[None, :, None, None])
    y = jnp.maximum(y, 0.0)
    B, C, H, W = y.shape
    dh = C // heads
    qkv = jnp.einsum('bchw,oc->bohw', y, qkv_w.reshape(3 * C, C))
    qkv = qkv.reshape(B, 3, heads, dh, H * W)
    q, k, v = qkv[:, 0], qkv[:, 1], qkv[:, 2]
    dot = jnp.einsum('bhin,bhjn->bhij', q, k) * (float(C) ** -0.5)
    attn = jax.nn.softmax(dot, axis=-1)
    out = jnp.einsum('bhij,bhjn->bhin', attn, v).reshape(B, C, H, W)
    return out, attn


if __name__ == "__main__":
    # Small shapes consistent with the module: NCHW image, out_planes % 4 == 0.
    B, CIN, COUT, H, W = 2, 8, 32, 8, 8
    HEADS = 4

    key = jax.random.PRNGKey(0)
    kx, kw, kb, kg, kbt, km, kv, kq = jax.random.split(key, 8)

    x = jax.random.normal(kx, (B, CIN, H, W), jnp.float32)
    bound = 1.0 / ((CIN * 9) ** 0.5)
    conv_w = jax.random.uniform(kw, (COUT, CIN, 3, 3), jnp.float32, -bound, bound)
    conv_b = jax.random.uniform(kb, (COUT,), jnp.float32, -bound, bound)
    gamma = 1.0 + 0.1 * jax.random.normal(kg, (COUT,), jnp.float32)
    beta = 0.1 * jax.random.normal(kbt, (COUT,), jnp.float32)
    running_mean = 0.1 * jax.random.normal(km, (COUT,), jnp.float32)
    running_var = 1.0 + 0.1 * jax.random.uniform(kv, (COUT,), jnp.float32)
    qb = 1.0 / (COUT ** 0.5)
    qkv_w = jax.random.uniform(kq, (3 * COUT, COUT, 1, 1), jnp.float32, -qb, qb)

    fwd = jax.jit(functools.partial(class_attention_block_forward,
                                    heads=HEADS, groups=1))
    out, attn = fwd(x, conv_w, conv_b, gamma, beta,
                    running_mean, running_var, qkv_w)
    out = jax.block_until_ready(out)
    attn = jax.block_until_ready(attn)

    ref_out, ref_attn = _reference(x, conv_w, conv_b, gamma, beta,
                                   running_mean, running_var, qkv_w,
                                   heads=HEADS)
    assert out.shape == (B, COUT, H, W)
    assert attn.shape == (B, HEADS, COUT // HEADS, COUT // HEADS)
    assert jnp.allclose(out, ref_out, atol=1e-4, rtol=1e-4), "out mismatch"
    assert jnp.allclose(attn, ref_attn, atol=1e-4, rtol=1e-4), "attn mismatch"

    print("KERNEL_OK")
</pallas_src>

<mosaic_0001>
module attributes {stable_mosaic.version = 11 : i64} {
  func.func @_cab_kernel(%arg0: i32, %arg1: memref<64x72xf32, #tpu.memory_space<vmem>>, %arg2: memref<72x32xf32, #tpu.memory_space<vmem>>, %arg3: memref<1x32xf32, #tpu.memory_space<vmem>>, %arg4: memref<32x96xf32, #tpu.memory_space<vmem>>, %arg5: memref<32x32xf32, #tpu.memory_space<vmem>>, %arg6: memref<1x32x64xf32, #tpu.memory_space<vmem>>, %arg7: memref<1x32x32xf32, #tpu.memory_space<vmem>>) attributes {dimension_semantics = [#tpu.dimension_semantics<parallel>], iteration_bounds = array<i64: 2>, scalar_prefetch = 0 : i64, scratch_operands = 0 : i64, tpu.core_type = #tpu.core_type<tc>, window_params = [{transform_indices = @transform_0, window_bounds = array<i64: 64, 72>}, {pipeline_mode = #tpu.pipeline_mode<synchronous>, transform_indices = @transform_1, window_bounds = array<i64: 72, 32>}, {pipeline_mode = #tpu.pipeline_mode<synchronous>, transform_indices = @transform_2, window_bounds = array<i64: 1, 32>}, {pipeline_mode = #tpu.pipeline_mode<synchronous>, transform_indices = @transform_3, window_bounds = array<i64: 32, 96>}, {pipeline_mode = #tpu.pipeline_mode<synchronous>, transform_indices = @transform_4, window_bounds = array<i64: 32, 32>}, {transform_indices = @transform_5, window_bounds = array<i64: 1, 32, 64>}, {transform_indices = @transform_6, window_bounds = array<i64: 1, 32, 32>}]} {
    %c0 = arith.constant 0 : index
    %c0_0 = arith.constant 0 : index
    %0 = vector.load %arg1[%c0, %c0_0] : memref<64x72xf32, #tpu.memory_space<vmem>>, vector<64x72xf32>
    %c0_1 = arith.constant 0 : index
    %c0_2 = arith.constant 0 : index
    %1 = vector.load %arg2[%c0_1, %c0_2] : memref<72x32xf32, #tpu.memory_space<vmem>>, vector<72x32xf32>
    %cst = arith.constant dense<0.000000e+00> : vector<64x32xf32>
    %2 = tpu.matmul %0, %1, %cst {dimension_numbers = #tpu.dot_dimension_numbers<[1], [0], [0], [1], [0, 0, 1, 1], [], []>} : vector<64x72xf32>, vector<72x32xf32>, vector<64x32xf32> -> vector<64x32xf32>
    %c0_3 = arith.constant 0 : index
    %c0_4 = arith.constant 0 : index
    %3 = vector.load %arg3[%c0_3, %c0_4] : memref<1x32xf32, #tpu.memory_space<vmem>>, vector<1x32xf32>
    %4 = vector.broadcast %3 : vector<1x32xf32> to vector<64x32xf32>
    %5 = arith.addf %2, %4 : vector<64x32xf32>
    %cst_5 = arith.constant 0.000000e+00 : f32
    %6 = vector.broadcast %cst_5 : f32 to vector<64x32xf32>
    %7 = arith.maximumf %5, %6 : vector<64x32xf32>
    %c0_6 = arith.constant 0 : index
    %c0_7 = arith.constant 0 : index
    %8 = vector.load %arg4[%c0_6, %c0_7] : memref<32x96xf32, #tpu.memory_space<vmem>>, vector<32x96xf32>
    %cst_8 = arith.constant dense<0.000000e+00> : vector<64x96xf32>
    %9 = tpu.matmul %7, %8, %cst_8 {dimension_numbers = #tpu.dot_dimension_numbers<[1], [0], [0], [1], [0, 0, 1, 1], [], []>} : vector<64x32xf32>, vector<32x96xf32>, vector<64x96xf32> -> vector<64x96xf32>
    %10 = vector.shape_cast %9 : vector<64x96xf32> to vector<1x64x96xf32>
    %11 = vector.extract_strided_slice %10 {offsets = [0, 0, 0], sizes = [1, 64, 32], strides = [1, 1, 1]} : vector<1x64x96xf32> to vector<1x64x32xf32>
    %12 = vector.extract_strided_slice %10 {offsets = [0, 0, 32], sizes = [1, 64, 32], strides = [1, 1, 1]} : vector<1x64x96xf32> to vector<1x64x32xf32>
    %13 = vector.extract_strided_slice %10 {offsets = [0, 0, 64], sizes = [1, 64, 32], strides = [1, 1, 1]} : vector<1x64x96xf32> to vector<1x64x32xf32>
    %cst_9 = arith.constant dense<0.000000e+00> : vector<1x32x32xf32>
    %14 = tpu.matmul %11, %12, %cst_9 {dimension_numbers = #tpu.dot_dimension_numbers<[1], [1], [2], [2], [0, 0, 0, 2, 1, 2], [0], [0]>} : vector<1x64x32xf32>, vector<1x64x32xf32>, vector<1x32x32xf32> -> vector<1x32x32xf32>
    %c0_10 = arith.constant 0 : index
    %c0_11 = arith.constant 0 : index
    %15 = vector.load %arg5[%c0_10, %c0_11] : memref<32x32xf32, #tpu.memory_space<vmem>>, vector<32x32xf32>
    %16 = vector.shape_cast %15 : vector<32x32xf32> to vector<1x32x32xf32>
    %17 = arith.addf %14, %16 : vector<1x32x32xf32>
    %cst_12 = arith.constant dense<0xFF800000> : vector<1x32xf32>
    %18 = vector.multi_reduction <maximumf>, %17, %cst_12 [2] : vector<1x32x32xf32> to vector<1x32xf32>
    %19 = vector.shape_cast %18 : vector<1x32xf32> to vector<1x32x1xf32>
    %20 = vector.broadcast %19 : vector<1x32x1xf32> to vector<1x32x32xf32>
    %21 = arith.subf %17, %20 : vector<1x32x32xf32>
    %22 = math.exp %21 : vector<1x32x32xf32>
    %cst_13 = arith.constant dense<0.000000e+00> : vector<1x32xf32>
    %23 = vector.multi_reduction <add>, %22, %cst_13 [2] : vector<1x32x32xf32> to vector<1x32xf32>
    %24 = vector.shape_cast %23 : vector<1x32xf32> to vector<1x32x1xf32>
    %25 = tpu.reciprocal %24 : vector<1x32x1xf32> -> vector<1x32x1xf32>
    %26 = vector.broadcast %25 : vector<1x32x1xf32> to vector<1x32x32xf32>
    %27 = arith.mulf %22, %26 : vector<1x32x32xf32>
    %c0_14 = arith.constant 0 : index
    %c0_15 = arith.constant 0 : index
    %c0_16 = arith.constant 0 : index
    %28 = vector.load %arg7[%c0_14, %c0_15, %c0_16] : memref<1x32x32xf32, #tpu.memory_space<vmem>>, vector<1x32x32xf32>
    tpu.vector_store %arg7[%c0_14, %c0_15, %c0_16], %27 {strides = array<i32>} : memref<1x32x32xf32, #tpu.memory_space<vmem>>, vector<1x32x32xf32>,
    %cst_17 = arith.constant dense<0.000000e+00> : vector<1x32x64xf32>
    %29 = tpu.matmul %27, %13, %cst_17 {dimension_numbers = #tpu.dot_dimension_numbers<[2], [2], [1], [1], [0, 0, 0, 1, 1, 1], [0], [0]>} : vector<1x32x32xf32>, vector<1x64x32xf32>, vector<1x32x64xf32> -> vector<1x32x64xf32>
    %c0_18 = arith.constant 0 : index
    %c0_19 = arith.constant 0 : index
    %c0_20 = arith.constant 0 : index
    %30 = vector.load %arg6[%c0_18, %c0_19, %c0_20] : memref<1x32x64xf32, #tpu.memory_space<vmem>>, vector<1x32x64xf32>
    tpu.vector_store %arg6[%c0_18, %c0_19, %c0_20], %29 {strides = array<i32>} : memref<1x32x64xf32, #tpu.memory_space<vmem>>, vector<1x32x64xf32>,
    return
  }
  func.func @transform_0(%arg0: i32) -> (i32, i32) {
    %c0_i32 = arith.constant 0 : i32
    %c0_i32_0 = arith.constant 0 : i32
    return %arg0, %c0_i32 : i32, i32
  }
  func.func @transform_1(%arg0: i32) -> (i32, i32) {
    %c0_i32 = arith.constant 0 : i32
    %c0_i32_0 = arith.constant 0 : i32
    %c0_i32_1 = arith.constant 0 : i32
    return %c0_i32, %c0_i32_0 : i32, i32
  }
  func.func @transform_2(%arg0: i32) -> (i32, i32) {
    %c0_i32 = arith.constant 0 : i32
    %c0_i32_0 = arith.constant 0 : i32
    %c0_i32_1 = arith.constant 0 : i32
    return %c0_i32, %c0_i32_0 : i32, i32
  }
  func.func @transform_3(%arg0: i32) -> (i32, i32) {
    %c0_i32 = arith.constant 0 : i32
    %c0_i32_0 = arith.constant 0 : i32
    %c0_i32_1 = arith.constant 0 : i32
    return %c0_i32, %c0_i32_0 : i32, i32
  }
  func.func @transform_4(%arg0: i32) -> (i32, i32) {
    %c0_i32 = arith.constant 0 : i32
    %c0_i32_0 = arith.constant 0 : i32
    %c0_i32_1 = arith.constant 0 : i32
    return %c0_i32, %c0_i32_0 : i32, i32
  }
  func.func @transform_5(%arg0: i32) -> (i32, i32, i32) {
    %c0_i32 = arith.constant 0 : i32
    %c0_i32_0 = arith.constant 0 : i32
    %c0_i32_1 = arith.constant 0 : i32
    return %arg0, %c0_i32, %c0_i32_0 : i32, i32, i32
  }
  func.func @transform_6(%arg0: i32) -> (i32, i32, i32) {
    %c0_i32 = arith.constant 0 : i32
    %c0_i32_0 = arith.constant 0 : i32
    %c0_i32_1 = arith.constant 0 : i32
    return %arg0, %c0_i32, %c0_i32_0 : i32, i32, i32
  }
}

</mosaic_0001>

<llo_original>
// kernel: class_attention_block_forward.1
$region0: #{class_attention_block_forward.1}
  #allocation0 [shape = 'u32[]', space=smem, size = 0x4, offset = 0x4, fixed_abs, tag = 'smem constant byte address 0x4 - core index']
  #allocation1 [shape = 'u32[72,128]{1,0:T(1,128)}', space=vmem, size = 0x9000, scoped, tag = 'internal scratch']
  %s0 = inlined_call_operand.vmem [shape: f32[128,72], index: 0, kind: input, shape index: {}]
  %s1 = inlined_call_operand.vmem [shape: f32[72,32], index: 1, kind: input, shape index: {}]
  %s2 = inlined_call_operand.vmem [shape: f32[1,32], index: 2, kind: input, shape index: {}]
  %s3 = inlined_call_operand.vmem [shape: f32[32,96], index: 3, kind: input, shape index: {}]
  %s4 = inlined_call_operand.vmem [shape: f32[32,32], index: 4, kind: input, shape index: {}]
  %s5 = inlined_call_operand.vmem [shape: f32[2,32,64], index: 5, kind: output, shape index: {0}]
  %s6 = inlined_call_operand.vmem [shape: f32[2,32,32], index: 6, kind: output, shape index: {1}]
  %7 = xla_tuple %s5, %s6
  %s8 = sld [smem:[#allocation0]]
  $region61: #{class_attention_block_forward.1} parent=0
    _
  %s10 = ssub.s32 1, %s8
  %s11 = scalar_select 0, %s10, %s8
  loop: start=0, step=1, limit=4
  $region2: #{class_attention_block_forward.1} parent=0 // loop_pre_header
    _
  $region3: #{class_attention_block_forward.1} parent=0 // loop_header
    %s13 = sphi 0, %s17
    %p14 = scmp.ge.s32.totalorder %s13, 4
    %s23 = sphi 0, %s25
    %s26 = sphi 0, %s23
    %s27 = sphi 0, %s26
    %s43 = sphi 0, %s27
    %s47 = sphi 0, %s47
    %s49 = sphi 0, %s47
    %s50 = sphi 0, %s49
    %s64 = sphi 0, %s50
    %s68 = sphi 0, %s68
    %s70 = sphi 0, %s68
    %s71 = sphi 0, %s70
    %s85 = sphi 0, %s71
    %s89 = sphi 0, %s89
    %s91 = sphi 0, %s89
    %s92 = sphi 0, %s91
    %s106 = sphi 0, %s92
    %s110 = sphi 0, %s110
    %s112 = sphi 0, %s110
    %s113 = sphi 0, %s112
    %s127 = sphi 0, %s113
    %s133 = sphi 0, %s135
    %s136 = sphi 0, %s133
    %s137 = sphi 0, %s136
    %s153 = sphi 0, %s137
    %s159 = sphi 0, %s161
    %s162 = sphi 0, %s159
    %s163 = sphi 0, %s162
    %s179 = sphi 0, %s163
  $region4: #{class_attention_block_forward.1} parent=0 // loop_header_branch
    %16 = sbr.rel (%p14) target = $region8
  $region5: #{class_attention_block_forward.1} parent=0 // loop_body
    %s18 = ssub.s32 %s13, 1
    %s19 = ssub.s32 %s13, 2
    %s20 = sadd.s32 %s13, 1
    %s21 = ssub.s32 %s13, %s20
    %p22 = scmp.eq.s32.totalorder %s21, 0
    %s24 = sadd.s32 %s23, 1
    %s25 = scalar_select %p22, %s23, %s24
    %p28 = pneg %p22
    %p29 = scmp.eq.s32.totalorder %s13, 1
    %p30 = por %p28, %p29
    %p31 = scmp.ne.s32.totalorder %s23, %s26
    %p32 = scmp.eq.s32.totalorder %s13, 0
    %p33 = por %p31, %p32
    %p34 = scmp.ne.s32.totalorder %s23, %s26
    %p35 = scmp.eq.s32.totalorder %s18, 1
    %p36 = por %p34, %p35
    %p37 = scmp.ne.s32.totalorder %s26, %s27
    %p38 = scmp.eq.s32.totalorder %s18, 0
    %p39 = por %p37, %p38
    %p40 = scmp.ne.s32.totalorder %s26, %s27
    %p41 = scmp.eq.s32.totalorder %s19, 1
    %p42 = por %p40, %p41
    %p44 = scmp.ne.s32.totalorder %s27, %s43
    %p45 = scmp.eq.s32.totalorder %s19, 0
    %p46 = por %p44, %p45
    %s48 = sadd.s32 %s47, 1
    %p51 = scmp.eq.s32.totalorder %s13, 1
    %p52 = scmp.ne.s32.totalorder %s47, %s49
    %p53 = scmp.eq.s32.totalorder %s13, 0
    %p54 = por %p52, %p53
    %p55 = scmp.ne.s32.totalorder %s47, %s49
    %p56 = scmp.eq.s32.totalorder %s18, 1
    %p57 = por %p55, %p56
    %p58 = scmp.ne.s32.totalorder %s49, %s50
    %p59 = scmp.eq.s32.totalorder %s18, 0
    %p60 = por %p58, %p59
    %p61 = scmp.ne.s32.totalorder %s49, %s50
    %p62 = scmp.eq.s32.totalorder %s19, 1
    %p63 = por %p61, %p62
    %p65 = scmp.ne.s32.totalorder %s50, %s64
    %p66 = scmp.eq.s32.totalorder %s19, 0
    %p67 = por %p65, %p66
    %s69 = sadd.s32 %s68, 1
    %p72 = scmp.eq.s32.totalorder %s13, 1
    %p73 = scmp.ne.s32.totalorder %s68, %s70
    %p74 = scmp.eq.s32.totalorder %s13, 0
    %p75 = por %p73, %p74
    %p76 = scmp.ne.s32.totalorder %s68, %s70
    %p77 = scmp.eq.s32.totalorder %s18, 1
    %p78 = por %p76, %p77
    %p79 = scmp.ne.s32.totalorder %s70, %s71
    %p80 = scmp.eq.s32.totalorder %s18, 0
    %p81 = por %p79, %p80
    %p82 = scmp.ne.s32.totalorder %s70, %s71
    %p83 = scmp.eq.s32.totalorder %s19, 1
    %p84 = por %p82, %p83
    %p86 = scmp.ne.s32.totalorder %s71, %s85
    %p87 = scmp.eq.s32.totalorder %s19, 0
    %p88 = por %p86, %p87
    %s90 = sadd.s32 %s89, 1
    %p93 = scmp.eq.s32.totalorder %s13, 1
    %p94 = scmp.ne.s32.totalorder %s89, %s91
    %p95 = scmp.eq.s32.totalorder %s13, 0
    %p96 = por %p94, %p95
    %p97 = scmp.ne.s32.totalorder %s89, %s91
    %p98 = scmp.eq.s32.totalorder %s18, 1
    %p99 = por %p97, %p98
    %p100 = scmp.ne.s32.totalorder %s91, %s92
    %p101 = scmp.eq.s32.totalorder %s18, 0
    %p102 = por %p100, %p101
    %p103 = scmp.ne.s32.totalorder %s91, %s92
    %p104 = scmp.eq.s32.totalorder %s19, 1
    %p105 = por %p103, %p104
    %p107 = scmp.ne.s32.totalorder %s92, %s106
    %p108 = scmp.eq.s32.totalorder %s19, 0
    %p109 = por %p107, %p108
    %s111 = sadd.s32 %s110, 1
    %p114 = scmp.eq.s32.totalorder %s13, 1
    %p115 = scmp.ne.s32.totalorder %s110, %s112
    %p116 = scmp.eq.s32.totalorder %s13, 0
    %p117 = por %p115, %p116
    %p118 = scmp.ne.s32.totalorder %s110, %s112
    %p119 = scmp.eq.s32.totalorder %s18, 1
    %p120 = por %p118, %p119
    %p121 = scmp.ne.s32.totalorder %s112, %s113
    %p122 = scmp.eq.s32.totalorder %s18, 0
    %p123 = por %p121, %p122
    %p124 = scmp.ne.s32.totalorder %s112, %s113
    %p125 = scmp.eq.s32.totalorder %s19, 1
    %p126 = por %p124, %p125
    %p128 = scmp.ne.s32.totalorder %s113, %s127
    %p129 = scmp.eq.s32.totalorder %s19, 0
    %p130 = por %p128, %p129
    %s131 = ssub.s32 %s13, %s20
    %p132 = scmp.eq.s32.totalorder %s131, 0
    %s134 = sadd.s32 %s133, 1
    %s135 = scalar_select %p132, %s133, %s134
    %p138 = pneg %p132
    %p139 = scmp.eq.s32.totalorder %s13, 1
    %p140 = por %p138, %p139
    %p141 = scmp.ne.s32.totalorder %s133, %s136
    %p142 = scmp.eq.s32.totalorder %s13, 0
    %p143 = por %p141, %p142
    %p144 = scmp.ne.s32.totalorder %s133, %s136
    %p145 = scmp.eq.s32.totalorder %s18, 1
    %p146 = por %p144, %p145
    %p147 = scmp.ne.s32.totalorder %s136, %s137
    %p148 = scmp.eq.s32.totalorder %s18, 0
    %p149 = por %p147, %p148
    %p150 = scmp.ne.s32.totalorder %s136, %s137
    %p151 = scmp.eq.s32.totalorder %s19, 1
    %p152 = por %p150, %p151
    %p154 = scmp.ne.s32.totalorder %s137, %s153
    %p155 = scmp.eq.s32.totalorder %s19, 0
    %p156 = por %p154, %p155
    %s157 = ssub.s32 %s13, %s20
    %p158 = scmp.eq.s32.totalorder %s157, 0
    %s160 = sadd.s32 %s159, 1
    %s161 = scalar_select %p158, %s159, %s160
    %p164 = pneg %p158
    %p165 = scmp.eq.s32.totalorder %s13, 1
    %p166 = por %p164, %p165
    %p167 = scmp.ne.s32.totalorder %s159, %s162
    %p168 = scmp.eq.s32.totalorder %s13, 0
    %p169 = por %p167, %p168
    %p170 = scmp.ne.s32.totalorder %s159, %s162
    %p171 = scmp.eq.s32.totalorder %s18, 1
    %p172 = por %p170, %p171
    %p173 = scmp.ne.s32.totalorder %s162, %s163
    %p174 = scmp.eq.s32.totalorder %s18, 0
    %p175 = por %p173, %p174
    %p176 = scmp.ne.s32.totalorder %s162, %s163
    %p177 = scmp.eq.s32.totalorder %s19, 1
    %p178 = por %p176, %p177
    %p180 = scmp.ne.s32.totalorder %s163, %s179
    %p181 = scmp.eq.s32.totalorder %s19, 0
    %p182 = por %p180, %p181
    %p183 = scmp.le.s32.totalorder 1, %s13
    %p184 = scmp.lt.s32.totalorder %s13, 3
    %p185 = pnand %p183, %p184
    %p186 = pneg %p185
    // Predicated region
    $region9: #{class_attention_block_forward.1} parent=5 // pred_check
      _
    $region10: #{class_attention_block_forward.1} parent=5 // pred_check_branch
      %188 = sbr.rel (%p185) target = $region12
    $region11: #{class_attention_block_forward.1} parent=5 // pred_region
      %s189 = ssub.s32 %s13, 1
      // Predicated region
      $region13: #{class_attention_block_forward.1} parent=11 // pred_check
        %p190 = pneg %p60
      $region14: #{class_attention_block_forward.1} parent=11 // pred_check_branch
        %192 = sbr.rel (%p190) target = $region16
      $region15: #{class_attention_block_forward.1} parent=11 // pred_region
        _
      $region16: #{class_attention_block_forward.1} parent=11 // pred_fallthru
        _
      // Predicated region
      $region17: #{class_attention_block_forward.1} parent=11 // pred_check
        %p193 = pneg %p81
      $region18: #{class_attention_block_forward.1} parent=11 // pred_check_branch
        %195 = sbr.rel (%p193) target = $region20
      $region19: #{class_attention_block_forward.1} parent=11 // pred_region
        _
      $region20: #{class_attention_block_forward.1} parent=11 // pred_fallthru
        _
      // Predicated region
      $region21: #{class_attention_block_forward.1} parent=11 // pred_check
        %p196 = pneg %p102
      $region22: #{class_attention_block_forward.1} parent=11 // pred_check_branch
        %198 = sbr.rel (%p196) target = $region24
      $region23: #{class_attention_block_forward.1} parent=11 // pred_region
        _
      $region24: #{class_attention_block_forward.1} parent=11 // pred_fallthru
        _
      // Predicated region
      $region25: #{class_attention_block_forward.1} parent=11 // pred_check
        %p199 = pneg %p123
      $region26: #{class_attention_block_forward.1} parent=11 // pred_check_branch
        %201 = sbr.rel (%p199) target = $region28
      $region27: #{class_attention_block_forward.1} parent=11 // pred_region
        _
      $region28: #{class_attention_block_forward.1} parent=11 // pred_fallthru
        _
    $region12: #{class_attention_block_forward.1} parent=5 // pred_fallthru
      _
    %p202 = scmp.lt.s32.totalorder %s13, 2
    // Predicated region
    $region29: #{class_attention_block_forward.1} parent=5 // pred_check
      %p203 = pneg %p202
    $region30: #{class_attention_block_forward.1} parent=5 // pred_check_branch
      %205 = sbr.rel (%p203) target = $region32
    $region31: #{class_attention_block_forward.1} parent=5 // pred_region
      // Predicated region
      $region33: #{class_attention_block_forward.1} parent=31 // pred_check
        %p206 = pneg %p33
      $region34: #{class_attention_block_forward.1} parent=31 // pred_check_branch
        %208 = sbr.rel (%p206) target = $region36
      $region35: #{class_attention_block_forward.1} parent=31 // pred_region
        %s209 = smul.u32 8, %s13
        %p210 = scmp.lt.s32.totalorder %s209, 15
        %s211 = scalar_select %p210, %s209, 15
        %s212 = smul.addr %s211, 8
        %s213 = scalar_lea.vmem %s0, %s212
        %s214 = smul.u32 8, %s13
      $region36: #{class_attention_block_forward.1} parent=31 // pred_fallthru
        _
    $region32: #{class_attention_block_forward.1} parent=5 // pred_fallthru
      _
    %p215 = scmp.le.s32.totalorder 1, %s13
    %p216 = scmp.lt.s32.totalorder %s13, 3
    %p217 = pnand %p215, %p216
    %p218 = pneg %p217
    // Predicated region
    $region37: #{class_attention_block_forward.1} parent=5 // pred_check
      _
    $region38: #{class_attention_block_forward.1} parent=5 // pred_check_branch
      %220 = sbr.rel (%p217) target = $region40
    $region39: #{class_attention_block_forward.1} parent=5 // pred_region
      %s221 = ssub.s32 %s13, 1
      %s222 = smul.u32 8, %s18
      %p223 = scmp.lt.s32.totalorder %s222, 15
      %s224 = scalar_select %p223, %s222, 15
      %s225 = smul.addr %s224, 8
      %s226 = scalar_lea.vmem %s0, %s225
      %p227 = pneg %p39
      %p228 = pneg %p36
      %p229 = pneg %p60
      %p230 = pneg %p57
      %p231 = pneg %p81
      %p232 = pneg %p78
      %p233 = pneg %p102
      %p234 = pneg %p99
      %p235 = pneg %p123
      %p236 = pneg %p120
      %p237 = pneg %p149
      %p238 = pneg %p146
      %p239 = scmp.lt.s32.totalorder %s18, 1
      %s240 = scalar_select %p239, %s18, 1
      %s241 = smul.addr %s240, 4
      %s242 = smul.addr %s241, 8
      %s243 = scalar_lea.vmem %s5, %s242
      %p244 = pneg %p175
      %p245 = pneg %p172
      %p246 = scmp.lt.s32.totalorder %s18, 1
      %s247 = scalar_select %p246, %s18, 1
      %s248 = smul.addr %s247, 4
      %s249 = smul.addr %s248, 8
      %s250 = scalar_lea.vmem %s6, %s249
      %s251 = smul.u32 8, %s18
      %p252 = scmp.lt.s32.totalorder %s251, 15
      %s253 = scalar_select %p252, %s251, 15
      %s254 = smul.addr %s253, 8
      %s255 = scalar_lea.vmem %s0, %s254
      %s256 = smul.u32 8, %s18
      %p257 = scmp.lt.s32.totalorder %s18, 1
      %s258 = scalar_select %p257, %s18, 1
      %s259 = smul.addr %s258, 4
      %s260 = smul.addr %s259, 8
      %s261 = scalar_lea.vmem %s5, %s260
      %p262 = scmp.lt.s32.totalorder %s18, 1
      %s263 = scalar_select %p262, %s18, 1
      %s264 = smul.addr %s263, 4
      %s265 = smul.addr %s264, 8
      %s266 = scalar_lea.vmem %s6, %s265
      %v267 = vld [vmem:[%s255] sm:$0xff]
      %v268 = vld [vmem:[%s255 + $0x8] sm:$0xff]
      %v269 = vld [vmem:[%s255 + $0x10] sm:$0xff]
      %v270 = vld [vmem:[%s255 + $0x18] sm:$0xff]
      %v271 = vld [vmem:[%s255 + $0x20] sm:$0xff]
      %v272 = vld [vmem:[%s255 + $0x28] sm:$0xff]
      %v273 = vld [vmem:[%s255 + $0x30] sm:$0xff]
      %v274 = vld [vmem:[%s255 + $0x38] sm:$0xff]
      %v275 = vld [vmem:[%s1] sm:$0xff]
      %v276 = vld [vmem:[%s1 + $0x8] sm:$0xff]
      %v277 = vld [vmem:[%s1 + $0x10] sm:$0xff]
      %v278 = vld [vmem:[%s1 + $0x18] sm:$0xff]
      %v279 = vld [vmem:[%s1 + $0x20] sm:$0xff]
      %v280 = vld [vmem:[%s1 + $0x28] sm:$0xff]
      %v281 = vld [vmem:[%s1 + $0x30] sm:$0xff]
      %v282 = vld [vmem:[%s1 + $0x38] sm:$0xff]
      %v283 = vld [vmem:[%s1 + $0x40] sm:$0xff]
      %v284 = vld [vmem:[%s2] sm:$0x1]
      %v286 = vperm.slane %v284, 0
      %vm288 = vcmask 588800
      %v290 = vsel %vm288, %v267, 0
      %v293 = vsel %vm288, %v268, 0
      %v296 = vsel %vm288, %v269, 0
      %v299 = vsel %vm288, %v270, 0
      %v302 = vsel %vm288, %v271, 0
      %v305 = vsel %vm288, %v272, 0
      %v308 = vsel %vm288, %v273, 0
      %v311 = vsel %vm288, %v274, 0
      %313 = vmatpush.msra.mxu0 0.0
      %314 = vmatpush.msra.mxu0 0.0
      %315 = vmatpush.msra.mxu0 0.0
      %316 = vmatpush.msra.mxu0 0.0
      %317 = vmatpush.msra.mxu0 0.0
      %318 = vmatpush.msra.mxu0 0.0
      %319 = vmatpush.msra.mxu0 0.0
      %320 = vmatpush.msra.mxu0 %v283
      %321 = vmatpush.msra.mxu0 %v282
      %322 = vmatpush.msra.mxu0 %v281
      %323 = vmatpush.msra.mxu0 %v280
      %324 = vmatpush.msra.mxu0 %v279
      %325 = vmatpush.msra.mxu0 %v278
      %326 = vmatpush.msra.mxu0 %v277
      %327 = vmatpush.msra.mxu0 %v276
      %328 = vmatpush.msra.mxu0 %v275
      %329 = vmatmul.f32.gmra.mxu0 %v290
      %v330 = vpop.f32.mrf.mxu0
      %v331 = vadd.f32 %v286, %v330
      %332 = vmatmul.f32.gmra.mxu0 %v293
      %v333 = vpop.f32.mrf.mxu0
      %v334 = vadd.f32 %v286, %v333
      %335 = vmatmul.f32.gmra.mxu0 %v296
      %v336 = vpop.f32.mrf.mxu0
      %v337 = vadd.f32 %v286, %v336
      %338 = vmatmul.f32.gmra.mxu0 %v299
      %v339 = vpop.f32.mrf.mxu0
      %v340 = vadd.f32 %v286, %v339
      %341 = vmatmul.f32.gmra.mxu0 %v302
      %v342 = vpop.f32.mrf.mxu0
      %v343 = vadd.f32 %v286, %v342
      %344 = vmatmul.f32.gmra.mxu0 %v305
      %v345 = vpop.f32.mrf.mxu0
      %v346 = vadd.f32 %v286, %v345
      %347 = vmatmul.f32.gmra.mxu0 %v308
      %v348 = vpop.f32.mrf.mxu0
      %v349 = vadd.f32 %v286, %v348
      %350 = vmatmul.f32.gmra.mxu0 %v311
      %v351 = vpop.f32.mrf.mxu0
      %v352 = vadd.f32 %v286, %v351
      %353 = vdwg.mxu0
      %v354 = vmax.f32 %v331, 0.0
      %v355 = vmax.f32 %v334, 0.0
      %v356 = vmax.f32 %v337, 0.0
      %v357 = vmax.f32 %v340, 0.0
      %v358 = vmax.f32 %v343, 0.0
      %v359 = vmax.f32 %v346, 0.0
      %v360 = vmax.f32 %v349, 0.0
      %v361 = vmax.f32 %v352, 0.0
      %v362 = vld [vmem:[%s3] sm:$0xff]
      %v363 = vld [vmem:[%s3 + $0x8] sm:$0xff]
      %v364 = vld [vmem:[%s3 + $0x10] sm:$0xff]
      %v365 = vld [vmem:[%s3 + $0x18] sm:$0xff]
      %vm366 = vcmask 261120
      %v368 = vsel %vm366, %v354, 0
      %v371 = vsel %vm366, %v355, 0
      %v374 = vsel %vm366, %v356, 0
      %v377 = vsel %vm366, %v357, 0
      %v380 = vsel %vm366, %v358, 0
      %v383 = vsel %vm366, %v359, 0
      %v386 = vsel %vm366, %v360, 0
      %v389 = vsel %vm366, %v361, 0
      %391 = vmatpush.msra.mxu0 0.0
      %392 = vmatpush.msra.mxu0 0.0
      %393 = vmatpush.msra.mxu0 0.0
      %394 = vmatpush.msra.mxu0 0.0
      %395 = vmatpush.msra.mxu0 0.0
      %396 = vmatpush.msra.mxu0 0.0
      %397 = vmatpush.msra.mxu0 0.0
      %398 = vmatpush.msra.mxu0 0.0
      %399 = vmatpush.msra.mxu0 0.0
      %400 = vmatpush.msra.mxu0 0.0
      %401 = vmatpush.msra.mxu0 0.0
      %402 = vmatpush.msra.mxu0 0.0
      %403 = vmatpush.msra.mxu0 %v365
      %404 = vmatpush.msra.mxu0 %v364
      %405 = vmatpush.msra.mxu0 %v363
      %406 = vmatpush.msra.mxu0 %v362
      %407 = vmatmul.f32.gmra.mxu0 %v368
      %v408 = vpop.f32.mrf.mxu0
      %v409 = vadd.f32 0.0, %v408
      %410 = vmatmul.f32.gmra.mxu0 %v371
      %v411 = vpop.f32.mrf.mxu0
      %v412 = vadd.f32 0.0, %v411
      %413 = vmatmul.f32.gmra.mxu0 %v374
      %v414 = vpop.f32.mrf.mxu0
      %v415 = vadd.f32 0.0, %v414
      %416 = vmatmul.f32.gmra.mxu0 %v377
      %v417 = vpop.f32.mrf.mxu0
      %v418 = vadd.f32 0.0, %v417
      %419 = vmatmul.f32.gmra.mxu0 %v380
      %v420 = vpop.f32.mrf.mxu0
      %v421 = vadd.f32 0.0, %v420
      %422 = vmatmul.f32.gmra.mxu0 %v383
      %v423 = vpop.f32.mrf.mxu0
      %v424 = vadd.f32 0.0, %v423
      %425 = vmatmul.f32.gmra.mxu0 %v386
      %v426 = vpop.f32.mrf.mxu0
      %v427 = vadd.f32 0.0, %v426
      %428 = vmatmul.f32.gmra.mxu0 %v389
      %v429 = vpop.f32.mrf.mxu0
      %v430 = vadd.f32 0.0, %v429
      %431 = vdwg.mxu0
      %v432 = vld [vmem:[%s4] sm:$0xff]
      %v433 = vld [vmem:[%s4 + $0x8] sm:$0xff]
      %v434 = vld [vmem:[%s4 + $0x10] sm:$0xff]
      %v435 = vld [vmem:[%s4 + $0x18] sm:$0xff]
      %436 = vxpose.xlu0.b32.start [1/16] %v409, 128
      %437 = vxpose.xlu0.b32.cont [2/16] %v412, 128
      %438 = vxpose.xlu0.b32.cont [3/16] %v415, 128
      %439 = vxpose.xlu0.b32.cont [4/16] %v418, 128
      %440 = vxpose.xlu0.b32.cont [5/16] %v421, 128
      %441 = vxpose.xlu0.b32.cont [6/16] %v424, 128
      %442 = vxpose.xlu0.b32.cont [7/16] %v427, 128
      %443 = vxpose.xlu0.b32.cont [8/16] %v430, 128
      %444 = vxpose.xlu0.b32.cont [9/16] 0.0, 128
      %445 = vxpose.xlu0.b32.cont [10/16] 0.0, 128
      %446 = vxpose.xlu0.b32.cont [11/16] 0.0, 128
      %447 = vxpose.xlu0.b32.cont [12/16] 0.0, 128
      %448 = vxpose.xlu0.b32.cont [13/16] 0.0, 128
      %449 = vxpose.xlu0.b32.cont [14/16] 0.0, 128
      %450 = vxpose.xlu0.b32.cont [15/16] 0.0, 128
      %451 = vxpose.xlu0.b32.end [16/16] 0.0, 128
      %v452 = vpop.trf.xlu0
      %v453 = vpop.trf.xlu0
      %v454 = vpop.trf.xlu0
      %v455 = vpop.trf.xlu0
      %v456 = vpop.trf.xlu0
      %v457 = vpop.trf.xlu0
      %v458 = vpop.trf.xlu0
      %v459 = vpop.trf.xlu0
      %v460 = vpop.trf.xlu0
      %v461 = vpop.trf.xlu0
      %v462 = vpop.trf.xlu0
      %v463 = vpop.trf.xlu0
      %v464 = vpop.trf.xlu0
      %v465 = vpop.trf.xlu0
      %v466 = vpop.trf.xlu0
      %v467 = vpop.trf.xlu0
      %476 = vrot.lane.b32.xlu0 %v409, 96
      %v477 = vpop.permute.xlu0 %476
      %478 = vrot.lane.b32.xlu0 %v412, 96
      %v479 = vpop.permute.xlu0 %478
      %480 = vrot.lane.b32.xlu0 %v415, 96
      %v481 = vpop.permute.xlu0 %480
      %482 = vrot.lane.b32.xlu0 %v418, 96
      %v483 = vpop.permute.xlu0 %482
      %484 = vrot.lane.b32.xlu0 %v421, 96
      %v485 = vpop.permute.xlu0 %484
      %486 = vrot.lane.b32.xlu0 %v424, 96
      %v487 = vpop.permute.xlu0 %486
      %488 = vrot.lane.b32.xlu0 %v427, 96
      %v489 = vpop.permute.xlu0 %488
      %490 = vrot.lane.b32.xlu0 %v430, 96
      %v491 = vpop.permute.xlu0 %490
      %vm500 = vcmask 523264
      %v502 = vsel %vm500, %v452, 0
      %v505 = vsel %vm500, %v453, 0
      %v508 = vsel %vm500, %v454, 0
      %v511 = vsel %vm500, %v455, 0
      %513 = vmatpush.msra.mxu0 0.0
      %514 = vmatpush.msra.mxu0 0.0
      %515 = vmatpush.msra.mxu0 0.0
      %516 = vmatpush.msra.mxu0 0.0
      %517 = vmatpush.msra.mxu0 0.0
      %518 = vmatpush.msra.mxu0 0.0
      %519 = vmatpush.msra.mxu0 0.0
      %520 = vmatpush.msra.mxu0 0.0
      %521 = vmatpush.msra.mxu0 %v491
      %522 = vmatpush.msra.mxu0 %v489
      %523 = vmatpush.msra.mxu0 %v487
      %524 = vmatpush.msra.mxu0 %v485
      %525 = vmatpush.msra.mxu0 %v483
      %526 = vmatpush.msra.mxu0 %v481
      %527 = vmatpush.msra.mxu0 %v479
      %528 = vmatpush.msra.mxu0 %v477
      %529 = vmatmul.f32.gmra.mxu0 %v502
      %v530 = vpop.f32.mrf.mxu0
      %v531 = vadd.f32 %v432, %v530
      %532 = vmatmul.f32.gmra.mxu0 %v505
      %v533 = vpop.f32.mrf.mxu0
      %v534 = vadd.f32 %v433, %v533
      %535 = vmatmul.f32.gmra.mxu0 %v508
      %v536 = vpop.f32.mrf.mxu0
      %v537 = vadd.f32 %v434, %v536
      %538 = vmatmul.f32.gmra.mxu0 %v511
      %v539 = vpop.f32.mrf.mxu0
      %v540 = vadd.f32 %v435, %v539
      %541 = vdwg.mxu0
      %v542 = vsel %vm366, %v531, -inf
      %543 = vmax.xlane.f32.xlu0 %v542
      %v544 = vpop.xlane.xlu0 %543
      %v545 = vsel %vm366, %v534, -inf
      %546 = vmax.xlane.f32.xlu0 %v545
      %v547 = vpop.xlane.xlu0 %546
      %v548 = vsel %vm366, %v537, -inf
      %549 = vmax.xlane.f32.xlu0 %v548
      %v550 = vpop.xlane.xlu0 %549
      %v551 = vsel %vm366, %v540, -inf
      %552 = vmax.xlane.f32.xlu0 %v551
      %v553 = vpop.xlane.xlu0 %552
      %v554 = vsub.f32 %v531, %v544
      %v555 = vsub.f32 %v534, %v547
      %v556 = vsub.f32 %v537, %v550
      %v557 = vsub.f32 %v540, %v553
      %v558 = vmul.f32 %v554, 1.442695
      %v559 = vpow.pop %v558
      %v560 = vmul.f32 %v555, 1.442695
      %v561 = vpow.pop %v560
      %v562 = vmul.f32 %v556, 1.442695
      %v563 = vpow.pop %v562
      %v564 = vmul.f32 %v557, 1.442695
      %v565 = vpow.pop %v564
      %v566 = vsel %vm366, %v559, 0.0
      %567 = vadd.xlane.f32.xlu0 %v566
      %v568 = vpop.xlane.xlu0 %567
      %v569 = vsel %vm366, %v561, 0.0
      %570 = vadd.xlane.f32.xlu0 %v569
      %v571 = vpop.xlane.xlu0 %570
      %v572 = vsel %vm366, %v563, 0.0
      %573 = vadd.xlane.f32.xlu0 %v572
      %v574 = vpop.xlane.xlu0 %573
      %v575 = vsel %vm366, %v565, 0.0
      %576 = vadd.xlane.f32.xlu0 %v575
      %v577 = vpop.xlane.xlu0 %576
      %v578 = vrcp.pop %v568
      %v579 = vmul.f32 %v568, %v578
      %v580 = vsub.f32 1.0, %v579
      %v581 = vmul.f32 %v578, %v580
      %v582 = vadd.f32 %v578, %v581
      %vm583 = vweird.f32 %v568
      %vm584 = vweird.f32 %v578
      %vm585 = vmor %vm583, %vm584
      %v586 = vsel %vm585, %v578, %v582
      %v587 = vand.u32 2147483647, %v568
      %vm588 = vcmp.eq.f32.partialorder %v587, 8.507059e+37
      %v589 = vand.u32 %v568, 2147483648
      %v590 = vor.u32 1.1754944e-38, %v589
      %v591 = vsel %vm588, %v590, %v586
      %v592 = vrcp.pop %v571
      %v593 = vmul.f32 %v571, %v592
      %v594 = vsub.f32 1.0, %v593
      %v595 = vmul.f32 %v592, %v594
      %v596 = vadd.f32 %v592, %v595
      %vm597 = vweird.f32 %v571
      %vm598 = vweird.f32 %v592
      %vm599 = vmor %vm597, %vm598
      %v600 = vsel %vm599, %v592, %v596
      %v601 = vand.u32 2147483647, %v571
      %vm602 = vcmp.eq.f32.partialorder %v601, 8.507059e+37
      %v603 = vand.u32 %v571, 2147483648
      %v604 = vor.u32 1.1754944e-38, %v603
      %v605 = vsel %vm602, %v604, %v600
      %v606 = vrcp.pop %v574
      %v607 = vmul.f32 %v574, %v606
      %v608 = vsub.f32 1.0, %v607
      %v609 = vmul.f32 %v606, %v608
      %v610 = vadd.f32 %v606, %v609
      %vm611 = vweird.f32 %v574
      %vm612 = vweird.f32 %v606
      %vm613 = vmor %vm611, %vm612
      %v614 = vsel %vm613, %v606, %v610
      %v615 = vand.u32 2147483647, %v574
      %vm616 = vcmp.eq.f32.partialorder %v615, 8.507059e+37
      %v617 = vand.u32 %v574, 2147483648
      %v618 = vor.u32 1.1754944e-38, %v617
      %v619 = vsel %vm616, %v618, %v614
      %v620 = vrcp.pop %v577
      %v621 = vmul.f32 %v577, %v620
      %v622 = vsub.f32 1.0, %v621
      %v623 = vmul.f32 %v620, %v622
      %v624 = vadd.f32 %v620, %v623
      %vm625 = vweird.f32 %v577
      %vm626 = vweird.f32 %v620
      %vm627 = vmor %vm625, %vm626
      %v628 = vsel %vm627, %v620, %v624
      %v629 = vand.u32 2147483647, %v577
      %vm630 = vcmp.eq.f32.partialorder %v629, 8.507059e+37
      %v631 = vand.u32 %v577, 2147483648
      %v632 = vor.u32 1.1754944e-38, %v631
      %v633 = vsel %vm630, %v632, %v628
      %v634 = vmul.f32 %v559, %v591
      %v635 = vmul.f32 %v561, %v605
      %v636 = vmul.f32 %v563, %v619
      %v637 = vmul.f32 %v565, %v633
      %638 = vst.msk [vmem:[%s266] sm:$0xff] %vm366, %v634
      %639 = vst.msk [vmem:[%s266 + $0x8] sm:$0xff] %vm366, %v635
      %640 = vst.msk [vmem:[%s266 + $0x10] sm:$0xff] %vm366, %v636
      %641 = vst.msk [vmem:[%s266 + $0x18] sm:$0xff] %vm366, %v637
      %642 = vrot.lane.b32.xlu0 %v409, 64
      %v643 = vpop.permute.xlu0 %642
      %644 = vrot.lane.b32.xlu0 %v412, 64
      %v645 = vpop.permute.xlu0 %644
      %646 = vrot.lane.b32.xlu0 %v415, 64
      %v647 = vpop.permute.xlu0 %646
      %648 = vrot.lane.b32.xlu0 %v418, 64
      %v649 = vpop.permute.xlu0 %648
      %650 = vrot.lane.b32.xlu0 %v421, 64
      %v651 = vpop.permute.xlu0 %650
      %652 = vrot.lane.b32.xlu0 %v424, 64
      %v653 = vpop.permute.xlu0 %652
      %654 = vrot.lane.b32.xlu0 %v427, 64
      %v655 = vpop.permute.xlu0 %654
      %656 = vrot.lane.b32.xlu0 %v430, 64
      %v657 = vpop.permute.xlu0 %656
      %v659 = vsel %vm366, %v634, 0
      %v662 = vsel %vm366, %v635, 0
      %v665 = vsel %vm366, %v636, 0
      %v668 = vsel %vm366, %v637, 0
      %v670 = vsel %vm366, %v643, 0
      %v672 = vsel %vm366, %v645, 0
      %v674 = vsel %vm366, %v647, 0
      %v676 = vsel %vm366, %v649, 0
      %v678 = vsel %vm366, %v651, 0
      %v680 = vsel %vm366, %v653, 0
      %v682 = vsel %vm366, %v655, 0
      %v684 = vsel %vm366, %v657, 0
      %686 = vmatpush.xpose.msra.mxu0 0.0
      %687 = vmatpush.xpose.msra.mxu0 0.0
      %688 = vmatpush.xpose.msra.mxu0 0.0
      %689 = vmatpush.xpose.msra.mxu0 0.0
      %690 = vmatpush.xpose.msra.mxu0 0.0
      %691 = vmatpush.xpose.msra.mxu0 0.0
      %692 = vmatpush.xpose.msra.mxu0 0.0
      %693 = vmatpush.xpose.msra.mxu0 0.0
      %694 = vmatpush.xpose.msra.mxu0 %v684
      %695 = vmatpush.xpose.msra.mxu0 %v682
      %696 = vmatpush.xpose.msra.mxu0 %v680
      %697 = vmatpush.xpose.msra.mxu0 %v678
      %698 = vmatpush.xpose.msra.mxu0 %v676
      %699 = vmatpush.xpose.msra.mxu0 %v674
      %700 = vmatpush.xpose.msra.mxu0 %v672
      %701 = vmatpush.xpose.msra.mxu0 %v670
      %702 = vmatmul.f32.gmra.mxu0 %v659
      %v703 = vpop.f32.mrf.mxu0
      %v704 = vadd.f32 0.0, %v703
      %705 = vmatmul.f32.gmra.mxu0 %v662
      %v706 = vpop.f32.mrf.mxu0
      %v707 = vadd.f32 0.0, %v706
      %708 = vmatmul.f32.gmra.mxu0 %v665
      %v709 = vpop.f32.mrf.mxu0
      %v710 = vadd.f32 0.0, %v709
      %711 = vmatmul.f32.gmra.mxu0 %v668
      %v712 = vpop.f32.mrf.mxu0
      %v713 = vadd.f32 0.0, %v712
      %714 = vdwg.mxu0
      %715 = vst.msk [vmem:[%s261] sm:$0xff] %vm500, %v704
      %716 = vst.msk [vmem:[%s261 + $0x8] sm:$0xff] %vm500, %v707
      %717 = vst.msk [vmem:[%s261 + $0x10] sm:$0xff] %vm500, %v710
      %718 = vst.msk [vmem:[%s261 + $0x18] sm:$0xff] %vm500, %v713
      %p719 = scmp.lt.s32.totalorder %s18, 1
      %s720 = scalar_select %p719, %s18, 1
      %s721 = smul.addr %s720, 4
      %s722 = smul.addr %s721, 8
      %s723 = scalar_lea.vmem %s5, %s722
      %p724 = scmp.lt.s32.totalorder %s18, 1
      %s725 = scalar_select %p724, %s18, 1
      %s726 = smul.addr %s725, 4
      %s727 = smul.addr %s726, 8
      %s728 = scalar_lea.vmem %s6, %s727
      // Predicated region
      $region41: #{class_attention_block_forward.1} parent=39 // pred_check
        %p729 = pneg %p146
      $region42: #{class_attention_block_forward.1} parent=39 // pred_check_branch
        %731 = sbr.rel (%p729) target = $region44
      $region43: #{class_attention_block_forward.1} parent=39 // pred_region
        _
      $region44: #{class_attention_block_forward.1} parent=39 // pred_fallthru
        _
      // Predicated region
      $region45: #{class_attention_block_forward.1} parent=39 // pred_check
        %p732 = pneg %p172
      $region46: #{class_attention_block_forward.1} parent=39 // pred_check_branch
        %734 = sbr.rel (%p732) target = $region48
      $region47: #{class_attention_block_forward.1} parent=39 // pred_region
        _
      $region48: #{class_attention_block_forward.1} parent=39 // pred_fallthru
        _
    $region40: #{class_attention_block_forward.1} parent=5 // pred_fallthru
      _
    %p735 = scmp.le.s32.totalorder 2, %s13
    // Predicated region
    $region49: #{class_attention_block_forward.1} parent=5 // pred_check
      %p736 = pneg %p735
    $region50: #{class_attention_block_forward.1} parent=5 // pred_check_branch
      %738 = sbr.rel (%p736) target = $region52
    $region51: #{class_attention_block_forward.1} parent=5 // pred_region
      %s739 = ssub.s32 %s13, 2
      // Predicated region
      $region53: #{class_attention_block_forward.1} parent=51 // pred_check
        %p740 = pneg %p152
      $region54: #{class_attention_block_forward.1} parent=51 // pred_check_branch
        %742 = sbr.rel (%p740) target = $region56
      $region55: #{class_attention_block_forward.1} parent=51 // pred_region
        %p743 = scmp.lt.s32.totalorder %s19, 1
        %s744 = scalar_select %p743, %s19, 1
        %s745 = smul.addr %s744, 4
        %s746 = smul.addr %s745, 8
        %s747 = scalar_lea.vmem %s5, %s746
      $region56: #{class_attention_block_forward.1} parent=51 // pred_fallthru
        _
      // Predicated region
      $region57: #{class_attention_block_forward.1} parent=51 // pred_check
        %p748 = pneg %p178
      $region58: #{class_attention_block_forward.1} parent=51 // pred_check_branch
        %750 = sbr.rel (%p748) target = $region60
      $region59: #{class_attention_block_forward.1} parent=51 // pred_region
        %p751 = scmp.lt.s32.totalorder %s19, 1
        %s752 = scalar_select %p751, %s19, 1
        %s753 = smul.addr %s752, 4
        %s754 = smul.addr %s753, 8
        %s755 = scalar_lea.vmem %s6, %s754
      $region60: #{class_attention_block_forward.1} parent=51 // pred_fallthru
        _
    $region52: #{class_attention_block_forward.1} parent=5 // pred_fallthru
      _
  $region6: #{class_attention_block_forward.1} parent=0 // loop_footer
    %s17 = sadd.s32 1, %s13
  $region7: #{class_attention_block_forward.1} parent=0 // loop_footer_branch
    %12 = sbr.rel target = $region3
  $region8: #{class_attention_block_forward.1} parent=0 // loop_exit
    _

</llo_original>
